<compile_context>
chip_gen: v7x
topology: tpu7x:2x2x1
jax: 0.10.0
libtpu: 0.0.40
codegen_flags: <defaults>
</compile_context>

<pallas_src>
import functools

import jax
import jax.numpy as jnp
from jax.experimental import pallas as pl
from jax.experimental.pallas import tpu as pltpu


def _round_up(x: int, m: int) -> int:
    return (x + m - 1) // m * m


def wordlenet_kernel(x_ref, w1_ref, b1_ref, w2_ref, b2_ref, o_ref):
    # fc1: (TB, Kp)@(Kp, H) on the MXU, bf16 operands, f32 accumulation.
    h = jnp.dot(x_ref[...], w1_ref[...], preferred_element_type=jnp.float32)
    h = jnp.maximum(h + b1_ref[...], 0.0)  # f32 bias add + ReLU on the VPU
    # fc2: (TB, H)@(H, Op) on the MXU, bf16 operands, f32 accumulation.
    out = jnp.dot(h.astype(jnp.bfloat16), w2_ref[...],
                  preferred_element_type=jnp.float32)
    o_ref[...] = (out + b2_ref[...]).astype(o_ref.dtype)


@functools.partial(jax.jit, static_argnames=("tile_b",))
def wordlenet_forward(x, w1, b1, w2, b2, *, tile_b=256):
    B, K = x.shape
    H = w1.shape[1]
    O = w2.shape[1]

    # ---- wrapper-side layout plumbing --------------------------------------
    K_pad = _round_up(K, 128)            # unmasked MXU contraction dim
    O_pad = _round_up(O, 128)            # lane-dense output (no vst.msk)
    tb = min(tile_b, _round_up(B, 8))    # small batches -> small batch tile
    B_pad = _round_up(B, tb)

    x_p = jnp.pad(x, ((0, B_pad - B), (0, K_pad - K))).astype(jnp.bfloat16)
    w1_p = jnp.pad(w1, ((0, K_pad - K), (0, 0))).astype(jnp.bfloat16)
    w2_p = jnp.pad(w2, ((0, 0), (0, O_pad - O))).astype(jnp.bfloat16)
    b1_p = b1.astype(jnp.float32)
    b2_p = jnp.pad(b2, ((0, 0), (0, O_pad - O))).astype(jnp.float32)

    grid = (B_pad // tb,)

    cost = pl.CostEstimate(
        flops=2 * B_pad * (K_pad * H + H * O_pad),
        transcendentals=0,
        bytes_accessed=(x_p.size * 2 + w1_p.size * 2 + w2_p.size * 2
                        + b1_p.size * 4 + b2_p.size * 4 + B_pad * O_pad * 4),
    )

    out = pl.pallas_call(
        wordlenet_kernel,
        out_shape=jax.ShapeDtypeStruct((B_pad, O_pad), jnp.float32),
        grid=grid,
        in_specs=[
            pl.BlockSpec((tb, K_pad), lambda i: (i, 0)),   # x: tiled over batch
            pl.BlockSpec((K_pad, H), lambda i: (0, 0)),    # w1: VMEM-resident
            pl.BlockSpec((1, H), lambda i: (0, 0)),        # b1: VMEM-resident
            pl.BlockSpec((H, O_pad), lambda i: (0, 0)),    # w2: VMEM-resident
            pl.BlockSpec((1, O_pad), lambda i: (0, 0)),    # b2: VMEM-resident
        ],
        out_specs=pl.BlockSpec((tb, O_pad), lambda i: (i, 0)),
        compiler_params=pltpu.CompilerParams(
            dimension_semantics=("parallel",)),
        cost_estimate=cost,
    )(x_p, w1_p, b1_p, w2_p, b2_p)

    return out[:B, :O]


def init_params(key, input_dim, hidden, output_dim):
    # Deterministic init mimicking PyTorch's default Linear init
    # (uniform(-1/sqrt(fan_in), 1/sqrt(fan_in))).
    k1, k2, k3, k4 = jax.random.split(key, 4)
    bound1 = 1.0 / jnp.sqrt(input_dim)
    bound2 = 1.0 / jnp.sqrt(hidden)
    w1 = jax.random.uniform(k1, (input_dim, hidden), jnp.float32, -bound1, bound1)
    b1 = jax.random.uniform(k2, (1, hidden), jnp.float32, -bound1, bound1)
    w2 = jax.random.uniform(k3, (hidden, output_dim), jnp.float32, -bound2, bound2)
    b2 = jax.random.uniform(k4, (1, output_dim), jnp.float32, -bound2, bound2)
    return w1, b1, w2, b2


def reference_forward(x, w1, b1, w2, b2):
    h = jnp.maximum(x @ w1 + b1, 0.0)
    return h @ w2 + b2


if __name__ == "__main__":
    batch, input_dim, hidden, output_dim = 8, 64, 256, 1

    key = jax.random.PRNGKey(0)
    kx, kp = jax.random.split(key)
    x = jax.random.normal(kx, (batch, input_dim), jnp.float32)
    w1, b1, w2, b2 = init_params(kp, input_dim, hidden, output_dim)

    out = wordlenet_forward(x, w1, b1, w2, b2)
    out = jax.block_until_ready(out)

    ref = reference_forward(x, w1, b1, w2, b2)
    assert out.shape == (batch, output_dim)
    # bf16 MXU operands with f32 accumulation -> loosened tolerance vs. f32 ref.
    assert jnp.allclose(out, ref, atol=3e-2, rtol=3e-2)

    print("KERNEL_OK")
</pallas_src>

<mosaic_0001>
module attributes {stable_mosaic.version = 11 : i64} {
  func.func @wordlenet_kernel(%arg0: i32, %arg1: memref<8x128xbf16, #tpu.memory_space<vmem>>, %arg2: memref<128x256xbf16, #tpu.memory_space<vmem>>, %arg3: memref<1x256xf32, #tpu.memory_space<vmem>>, %arg4: memref<256x128xbf16, #tpu.memory_space<vmem>>, %arg5: memref<1x128xf32, #tpu.memory_space<vmem>>, %arg6: memref<8x128xf32, #tpu.memory_space<vmem>>) attributes {dimension_semantics = [#tpu.dimension_semantics<parallel>], iteration_bounds = array<i64: 1>, scalar_prefetch = 0 : i64, scratch_operands = 0 : i64, tpu.core_type = #tpu.core_type<tc>, window_params = [{transform_indices = @transform_0, window_bounds = array<i64: 8, 128>}, {pipeline_mode = #tpu.pipeline_mode<synchronous>, transform_indices = @transform_1, window_bounds = array<i64: 128, 256>}, {pipeline_mode = #tpu.pipeline_mode<synchronous>, transform_indices = @transform_2, window_bounds = array<i64: 1, 256>}, {pipeline_mode = #tpu.pipeline_mode<synchronous>, transform_indices = @transform_3, window_bounds = array<i64: 256, 128>}, {pipeline_mode = #tpu.pipeline_mode<synchronous>, transform_indices = @transform_4, window_bounds = array<i64: 1, 128>}, {transform_indices = @transform_5, window_bounds = array<i64: 8, 128>}]} {
    %c0 = arith.constant 0 : index
    %c0_0 = arith.constant 0 : index
    %0 = vector.load %arg1[%c0, %c0_0] : memref<8x128xbf16, #tpu.memory_space<vmem>>, vector<8x128xbf16>
    %c0_1 = arith.constant 0 : index
    %c0_2 = arith.constant 0 : index
    %1 = vector.load %arg2[%c0_1, %c0_2] : memref<128x256xbf16, #tpu.memory_space<vmem>>, vector<128x256xbf16>
    %cst = arith.constant dense<0.000000e+00> : vector<8x256xf32>
    %2 = tpu.matmul %0, %1, %cst {dimension_numbers = #tpu.dot_dimension_numbers<[1], [0], [0], [1], [0, 0, 1, 1], [], []>} : vector<8x128xbf16>, vector<128x256xbf16>, vector<8x256xf32> -> vector<8x256xf32>
    %c0_3 = arith.constant 0 : index
    %c0_4 = arith.constant 0 : index
    %3 = vector.load %arg3[%c0_3, %c0_4] : memref<1x256xf32, #tpu.memory_space<vmem>>, vector<1x256xf32>
    %4 = vector.broadcast %3 : vector<1x256xf32> to vector<8x256xf32>
    %5 = arith.addf %2, %4 : vector<8x256xf32>
    %cst_5 = arith.constant 0.000000e+00 : f32
    %6 = vector.broadcast %cst_5 : f32 to vector<8x256xf32>
    %7 = arith.maximumf %5, %6 : vector<8x256xf32>
    %8 = arith.truncf %7 : vector<8x256xf32> to vector<8x256xbf16>
    %c0_6 = arith.constant 0 : index
    %c0_7 = arith.constant 0 : index
    %9 = vector.load %arg4[%c0_6, %c0_7] : memref<256x128xbf16, #tpu.memory_space<vmem>>, vector<256x128xbf16>
    %cst_8 = arith.constant dense<0.000000e+00> : vector<8x128xf32>
    %10 = tpu.matmul %8, %9, %cst_8 {dimension_numbers = #tpu.dot_dimension_numbers<[1], [0], [0], [1], [0, 0, 1, 1], [], []>} : vector<8x256xbf16>, vector<256x128xbf16>, vector<8x128xf32> -> vector<8x128xf32>
    %c0_9 = arith.constant 0 : index
    %c0_10 = arith.constant 0 : index
    %11 = vector.load %arg5[%c0_9, %c0_10] : memref<1x128xf32, #tpu.memory_space<vmem>>, vector<1x128xf32>
    %12 = vector.broadcast %11 : vector<1x128xf32> to vector<8x128xf32>
    %13 = arith.addf %10, %12 : vector<8x128xf32>
    %c0_11 = arith.constant 0 : index
    %c0_12 = arith.constant 0 : index
    %14 = vector.load %arg6[%c0_11, %c0_12] : memref<8x128xf32, #tpu.memory_space<vmem>>, vector<8x128xf32>
    tpu.vector_store %arg6[%c0_11, %c0_12], %13 {strides = array<i32>} : memref<8x128xf32, #tpu.memory_space<vmem>>, vector<8x128xf32>,
    return
  }
  func.func @transform_0(%arg0: i32) -> (i32, i32) {
    %c0_i32 = arith.constant 0 : i32
    %c0_i32_0 = arith.constant 0 : i32
    return %arg0, %c0_i32 : i32, i32
  }
  func.func @transform_1(%arg0: i32) -> (i32, i32) {
    %c0_i32 = arith.constant 0 : i32
    %c0_i32_0 = arith.constant 0 : i32
    %c0_i32_1 = arith.constant 0 : i32
    return %c0_i32, %c0_i32_0 : i32, i32
  }
  func.func @transform_2(%arg0: i32) -> (i32, i32) {
    %c0_i32 = arith.constant 0 : i32
    %c0_i32_0 = arith.constant 0 : i32
    %c0_i32_1 = arith.constant 0 : i32
    return %c0_i32, %c0_i32_0 : i32, i32
  }
  func.func @transform_3(%arg0: i32) -> (i32, i32) {
    %c0_i32 = arith.constant 0 : i32
    %c0_i32_0 = arith.constant 0 : i32
    %c0_i32_1 = arith.constant 0 : i32
    return %c0_i32, %c0_i32_0 : i32, i32
  }
  func.func @transform_4(%arg0: i32) -> (i32, i32) {
    %c0_i32 = arith.constant 0 : i32
    %c0_i32_0 = arith.constant 0 : i32
    %c0_i32_1 = arith.constant 0 : i32
    return %c0_i32, %c0_i32_0 : i32, i32
  }
  func.func @transform_5(%arg0: i32) -> (i32, i32) {
    %c0_i32 = arith.constant 0 : i32
    %c0_i32_0 = arith.constant 0 : i32
    return %arg0, %c0_i32 : i32, i32
  }
}

</mosaic_0001>

<llo_original>
// kernel: wordlenet_forward.1
$region0: #{wordlenet_forward.1}
  #allocation0 [shape = 'u32[]', space=smem, size = 0x4, offset = 0x4, fixed_abs, tag = 'smem constant byte address 0x4 - core index']
  #allocation1 [shape = 'u32[144,128]{1,0:T(1,128)}', space=vmem, size = 0x12000, scoped, tag = 'internal scratch']
  %s0 = inlined_call_operand.vmem [shape: bf16[8,128], index: 0, kind: input, shape index: {}]
  %s1 = inlined_call_operand.vmem [shape: bf16[128,256], index: 1, kind: input, shape index: {}]
  %s2 = inlined_call_operand.vmem [shape: f32[1,256], index: 2, kind: input, shape index: {}]
  %s3 = inlined_call_operand.vmem [shape: bf16[256,128], index: 3, kind: input, shape index: {}]
  %s4 = inlined_call_operand.vmem [shape: f32[1,128], index: 4, kind: input, shape index: {}]
  %s5 = inlined_call_operand.vmem [shape: f32[8,128], index: 5, kind: output, shape index: {}]
  %s6 = sld [smem:[#allocation0]]
  $region30: #{wordlenet_forward.1} parent=0
    _
  %s8 = ssub.s32 1, %s6
  %s9 = scalar_select 0, %s8, %s6
  // Predicated region
  $region2: #{wordlenet_forward.1} parent=0 // pred_check
    _
  $region3: #{wordlenet_forward.1} parent=0 // pred_check_branch
    %11 = sbr.rel (0) target = $region5
  $region4: #{wordlenet_forward.1} parent=0 // pred_region
    _
  $region5: #{wordlenet_forward.1} parent=0 // pred_fallthru
    _
  // Predicated region
  $region6: #{wordlenet_forward.1} parent=0 // pred_check
    _
  $region7: #{wordlenet_forward.1} parent=0 // pred_check_branch
    %13 = sbr.rel (0) target = $region9
  $region8: #{wordlenet_forward.1} parent=0 // pred_region
    _
  $region9: #{wordlenet_forward.1} parent=0 // pred_fallthru
    _
  // Predicated region
  $region10: #{wordlenet_forward.1} parent=0 // pred_check
    _
  $region11: #{wordlenet_forward.1} parent=0 // pred_check_branch
    %15 = sbr.rel (0) target = $region13
  $region12: #{wordlenet_forward.1} parent=0 // pred_region
    _
  $region13: #{wordlenet_forward.1} parent=0 // pred_fallthru
    _
  // Predicated region
  $region14: #{wordlenet_forward.1} parent=0 // pred_check
    _
  $region15: #{wordlenet_forward.1} parent=0 // pred_check_branch
    %17 = sbr.rel (0) target = $region17
  $region16: #{wordlenet_forward.1} parent=0 // pred_region
    _
  $region17: #{wordlenet_forward.1} parent=0 // pred_fallthru
    _
  // Predicated region
  $region18: #{wordlenet_forward.1} parent=0 // pred_check
    _
  $region19: #{wordlenet_forward.1} parent=0 // pred_check_branch
    %19 = sbr.rel (0) target = $region21
  $region20: #{wordlenet_forward.1} parent=0 // pred_region
    _
  $region21: #{wordlenet_forward.1} parent=0 // pred_fallthru
    _
  %v21 = vld [vmem:[%s0] sm:$0xf]
  %v22 = vld [vmem:[%s1] sm:$0xff]
  %v23 = vld [vmem:[%s1 + $0x8] sm:$0xff]
  %v24 = vld [vmem:[%s1 + $0x10] sm:$0xff]
  %v25 = vld [vmem:[%s1 + $0x18] sm:$0xff]
  %v26 = vld [vmem:[%s1 + $0x20] sm:$0xff]
  %v27 = vld [vmem:[%s1 + $0x28] sm:$0xff]
  %v28 = vld [vmem:[%s1 + $0x30] sm:$0xff]
  %v29 = vld [vmem:[%s1 + $0x38] sm:$0xff]
  %v30 = vld [vmem:[%s1 + $0x40] sm:$0xff]
  %v31 = vld [vmem:[%s1 + $0x48] sm:$0xff]
  %v32 = vld [vmem:[%s1 + $0x50] sm:$0xff]
  %v33 = vld [vmem:[%s1 + $0x58] sm:$0xff]
  %v34 = vld [vmem:[%s1 + $0x60] sm:$0xff]
  %v35 = vld [vmem:[%s1 + $0x68] sm:$0xff]
  %v36 = vld [vmem:[%s1 + $0x70] sm:$0xff]
  %v37 = vld [vmem:[%s1 + $0x78] sm:$0xff]
  %v38 = vld [vmem:[%s2] sm:$0x3]
  %v40 = vlaneseq
  %v41 = vshrl.u32 %v40, 7
  %v42 = vsub.s32 0, %v41
  %v43 = vrot.slane %v38, %v42
  %v44 = vlaneseq
  %v45 = vshrl.u32 %v44, 7
  %v46 = vsub.s32 1, %v45
  %v47 = vrot.slane %v38, %v46
  %v66 = vunpack.c.l.b16 %v22
  %v67 = vunpack.c.h.b16 %v22
  %v68 = vunpack.c.l.b16 %v23
  %v69 = vunpack.c.h.b16 %v23
  %v70 = vunpack.c.l.b16 %v24
  %v71 = vunpack.c.h.b16 %v24
  %v72 = vunpack.c.l.b16 %v25
  %v73 = vunpack.c.h.b16 %v25
  %v74 = vunpack.c.l.b16 %v26
  %v75 = vunpack.c.h.b16 %v26
  %v76 = vunpack.c.l.b16 %v27
  %v77 = vunpack.c.h.b16 %v27
  %v78 = vunpack.c.l.b16 %v28
  %v79 = vunpack.c.h.b16 %v28
  %v80 = vunpack.c.l.b16 %v29
  %v81 = vunpack.c.h.b16 %v29
  %v82 = vunpack.c.l.b16 %v30
  %v83 = vunpack.c.h.b16 %v30
  %v84 = vunpack.c.l.b16 %v31
  %v85 = vunpack.c.h.b16 %v31
  %v86 = vunpack.c.l.b16 %v32
  %v87 = vunpack.c.h.b16 %v32
  %v88 = vunpack.c.l.b16 %v33
  %v89 = vunpack.c.h.b16 %v33
  %v90 = vunpack.c.l.b16 %v34
  %v91 = vunpack.c.h.b16 %v34
  %v92 = vunpack.c.l.b16 %v35
  %v93 = vunpack.c.h.b16 %v35
  %v94 = vunpack.c.l.b16 %v36
  %v95 = vunpack.c.h.b16 %v36
  %v96 = vunpack.c.l.b16 %v37
  %v97 = vunpack.c.h.b16 %v37
  %v98 = vpack.c.b16 %v68, %v66
  %v99 = vpack.c.b16 %v69, %v67
  %v100 = vpack.c.b16 %v72, %v70
  %v101 = vpack.c.b16 %v73, %v71
  %v102 = vpack.c.b16 %v76, %v74
  %v103 = vpack.c.b16 %v77, %v75
  %v104 = vpack.c.b16 %v80, %v78
  %v105 = vpack.c.b16 %v81, %v79
  %v106 = vpack.c.b16 %v84, %v82
  %v107 = vpack.c.b16 %v85, %v83
  %v108 = vpack.c.b16 %v88, %v86
  %v109 = vpack.c.b16 %v89, %v87
  %v110 = vpack.c.b16 %v92, %v90
  %v111 = vpack.c.b16 %v93, %v91
  %v112 = vpack.c.b16 %v96, %v94
  %v113 = vpack.c.b16 %v97, %v95
  %130 = vmatprep.subr.bf16.mxu0 %v99
  %131 = vmatpush1.bf16.msra.mxu0 %v98
  %132 = vmatprep.subr.bf16.mxu0 %v101
  %133 = vmatpush1.bf16.msra.mxu0 %v100
  %134 = vmatprep.subr.bf16.mxu0 %v103
  %135 = vmatpush1.bf16.msra.mxu0 %v102
  %136 = vmatprep.subr.bf16.mxu0 %v105
  %137 = vmatpush1.bf16.msra.mxu0 %v104
  %138 = vmatprep.subr.bf16.mxu0 %v107
  %139 = vmatpush1.bf16.msra.mxu0 %v106
  %140 = vmatprep.subr.bf16.mxu0 %v109
  %141 = vmatpush1.bf16.msra.mxu0 %v108
  %142 = vmatprep.subr.bf16.mxu0 %v111
  %143 = vmatpush1.bf16.msra.mxu0 %v110
  %144 = vmatprep.subr.bf16.mxu0 %v113
  %145 = vmatpush1.bf16.msra.mxu0 %v112
  %146 = vmatprep.subr.bf16.mxu0 0
  %147 = vmatpush1.bf16.msra.mxu0 0
  %148 = vmatprep.subr.bf16.mxu0 0
  %149 = vmatpush1.bf16.msra.mxu0 0
  %150 = vmatprep.subr.bf16.mxu0 0
  %151 = vmatpush1.bf16.msra.mxu0 0
  %152 = vmatprep.subr.bf16.mxu0 0
  %153 = vmatpush1.bf16.msra.mxu0 0
  %154 = vmatprep.subr.bf16.mxu0 0
  %155 = vmatpush1.bf16.msra.mxu0 0
  %156 = vmatprep.subr.bf16.mxu0 0
  %157 = vmatpush1.bf16.msra.mxu0 0
  %158 = vmatprep.subr.bf16.mxu0 0
  %159 = vmatpush1.bf16.msra.mxu0 0
  %160 = vmatprep.subr.bf16.mxu0 0
  %161 = vmatpush1.bf16.msra.mxu0 0
  %162 = vmatprep.mubr.bf16.mxu0 0
  %163 = vmatmul.mubr.bf16.gmra.mrb[0].mxu0 %v21
  %v164 = vpop.f32.mrb[0].mxu0
  %v165 = vadd.f32 %v43, %v164
  %v166 = vpop.f32.mrb[0].mxu0
  %v167 = vadd.f32 %v47, %v166
  %v168 = vpop.f32.mrb[0].mxu0
  %v169 = vpop.f32.mrb[0].mxu0
  %170 = vdwg.mxu0
  %v171 = vmax.f32 %v165, 0.0
  %v172 = vmax.f32 %v167, 0.0
  %v173 = vpack.c.bf16 %v171, %v171
  %v174 = vpack.c.bf16 %v172, %v172
  %v175 = vld [vmem:[%s3] sm:$0xf]
  %v176 = vld [vmem:[%s3 + $0x4] sm:$0xf]
  %v177 = vld [vmem:[%s3 + $0x8] sm:$0xf]
  %v178 = vld [vmem:[%s3 + $0xc] sm:$0xf]
  %v179 = vld [vmem:[%s3 + $0x10] sm:$0xf]
  %v180 = vld [vmem:[%s3 + $0x14] sm:$0xf]
  %v181 = vld [vmem:[%s3 + $0x18] sm:$0xf]
  %v182 = vld [vmem:[%s3 + $0x1c] sm:$0xf]
  %v183 = vld [vmem:[%s3 + $0x20] sm:$0xf]
  %v184 = vld [vmem:[%s3 + $0x24] sm:$0xf]
  %v185 = vld [vmem:[%s3 + $0x28] sm:$0xf]
  %v186 = vld [vmem:[%s3 + $0x2c] sm:$0xf]
  %v187 = vld [vmem:[%s3 + $0x30] sm:$0xf]
  %v188 = vld [vmem:[%s3 + $0x34] sm:$0xf]
  %v189 = vld [vmem:[%s3 + $0x38] sm:$0xf]
  %v190 = vld [vmem:[%s3 + $0x3c] sm:$0xf]
  %v191 = vld [vmem:[%s3 + $0x40] sm:$0xf]
  %v192 = vld [vmem:[%s3 + $0x44] sm:$0xf]
  %v193 = vld [vmem:[%s3 + $0x48] sm:$0xf]
  %v194 = vld [vmem:[%s3 + $0x4c] sm:$0xf]
  %v195 = vld [vmem:[%s3 + $0x50] sm:$0xf]
  %v196 = vld [vmem:[%s3 + $0x54] sm:$0xf]
  %v197 = vld [vmem:[%s3 + $0x58] sm:$0xf]
  %v198 = vld [vmem:[%s3 + $0x5c] sm:$0xf]
  %v199 = vld [vmem:[%s3 + $0x60] sm:$0xf]
  %v200 = vld [vmem:[%s3 + $0x64] sm:$0xf]
  %v201 = vld [vmem:[%s3 + $0x68] sm:$0xf]
  %v202 = vld [vmem:[%s3 + $0x6c] sm:$0xf]
  %v203 = vld [vmem:[%s3 + $0x70] sm:$0xf]
  %v204 = vld [vmem:[%s3 + $0x74] sm:$0xf]
  %v205 = vld [vmem:[%s3 + $0x78] sm:$0xf]
  %v206 = vld [vmem:[%s3 + $0x7c] sm:$0xf]
  %v207 = vld [vmem:[%s4] sm:$0x1]
  %v209 = vlaneseq
  %v210 = vshrl.u32 %v209, 7
  %v211 = vsub.s32 0, %v210
  %v212 = vrot.slane %v207, %v211
  %v246 = vunpack.c.l.b16 %v175
  %v247 = vunpack.c.l.b16 %v176
  %v248 = vunpack.c.l.b16 %v177
  %v249 = vunpack.c.l.b16 %v178
  %v250 = vunpack.c.l.b16 %v179
  %v251 = vunpack.c.l.b16 %v180
  %v252 = vunpack.c.l.b16 %v181
  %v253 = vunpack.c.l.b16 %v182
  %v254 = vunpack.c.l.b16 %v183
  %v255 = vunpack.c.l.b16 %v184
  %v256 = vunpack.c.l.b16 %v185
  %v257 = vunpack.c.l.b16 %v186
  %v258 = vunpack.c.l.b16 %v187
  %v259 = vunpack.c.l.b16 %v188
  %v260 = vunpack.c.l.b16 %v189
  %v261 = vunpack.c.l.b16 %v190
  %v262 = vunpack.c.l.b16 %v191
  %v263 = vunpack.c.l.b16 %v192
  %v264 = vunpack.c.l.b16 %v193
  %v265 = vunpack.c.l.b16 %v194
  %v266 = vunpack.c.l.b16 %v195
  %v267 = vunpack.c.l.b16 %v196
  %v268 = vunpack.c.l.b16 %v197
  %v269 = vunpack.c.l.b16 %v198
  %v270 = vunpack.c.l.b16 %v199
  %v271 = vunpack.c.l.b16 %v200
  %v272 = vunpack.c.l.b16 %v201
  %v273 = vunpack.c.l.b16 %v202
  %v274 = vunpack.c.l.b16 %v203
  %v275 = vunpack.c.l.b16 %v204
  %v276 = vunpack.c.l.b16 %v205
  %v277 = vunpack.c.l.b16 %v206
  %v278 = vpack.c.b16 %v247, %v246
  %v279 = vpack.c.b16 %v249, %v248
  %v280 = vpack.c.b16 %v251, %v250
  %v281 = vpack.c.b16 %v253, %v252
  %v282 = vpack.c.b16 %v255, %v254
  %v283 = vpack.c.b16 %v257, %v256
  %v284 = vpack.c.b16 %v259, %v258
  %v285 = vpack.c.b16 %v261, %v260
  %v286 = vpack.c.b16 %v263, %v262
  %v287 = vpack.c.b16 %v265, %v264
  %v288 = vpack.c.b16 %v267, %v266
  %v289 = vpack.c.b16 %v269, %v268
  %v290 = vpack.c.b16 %v271, %v270
  %v291 = vpack.c.b16 %v273, %v272
  %v292 = vpack.c.b16 %v275, %v274
  %v293 = vpack.c.b16 %v277, %v276
  %310 = vmatprep.subr.bf16.mxu0 0
  %311 = vmatpush1.bf16.msra.mxu0 %v278
  %312 = vmatprep.subr.bf16.mxu0 0
  %313 = vmatpush1.bf16.msra.mxu0 %v279
  %314 = vmatprep.subr.bf16.mxu0 0
  %315 = vmatpush1.bf16.msra.mxu0 %v280
  %316 = vmatprep.subr.bf16.mxu0 0
  %317 = vmatpush1.bf16.msra.mxu0 %v281
  %318 = vmatprep.subr.bf16.mxu0 0
  %319 = vmatpush1.bf16.msra.mxu0 %v282
  %320 = vmatprep.subr.bf16.mxu0 0
  %321 = vmatpush1.bf16.msra.mxu0 %v283
  %322 = vmatprep.subr.bf16.mxu0 0
  %323 = vmatpush1.bf16.msra.mxu0 %v284
  %324 = vmatprep.subr.bf16.mxu0 0
  %325 = vmatpush1.bf16.msra.mxu0 %v285
  %326 = vmatprep.subr.bf16.mxu0 0
  %327 = vmatpush1.bf16.msra.mxu0 %v286
  %328 = vmatprep.subr.bf16.mxu0 0
  %329 = vmatpush1.bf16.msra.mxu0 %v287
  %330 = vmatprep.subr.bf16.mxu0 0
  %331 = vmatpush1.bf16.msra.mxu0 %v288
  %332 = vmatprep.subr.bf16.mxu0 0
  %333 = vmatpush1.bf16.msra.mxu0 %v289
  %334 = vmatprep.subr.bf16.mxu0 0
  %335 = vmatpush1.bf16.msra.mxu0 %v290
  %336 = vmatprep.subr.bf16.mxu0 0
  %337 = vmatpush1.bf16.msra.mxu0 %v291
  %338 = vmatprep.subr.bf16.mxu0 0
  %339 = vmatpush1.bf16.msra.mxu0 %v292
  %340 = vmatprep.subr.bf16.mxu0 0
  %341 = vmatpush1.bf16.msra.mxu0 %v293
  %342 = vmatprep.mubr.bf16.mxu0 %v174
  %343 = vmatmul.mubr.bf16.gmra.mrb[0].mxu0 %v173
  %v344 = vpop.f32.mrb[0].mxu0
  %v345 = vadd.f32 %v212, %v344
  %v346 = vpop.f32.mrb[0].mxu0
  %v347 = vpop.f32.mrb[0].mxu0
  %v348 = vpop.f32.mrb[0].mxu0
  %349 = vdwg.mxu0
  %350 = vst [vmem:[%s5] sm:$0xff] %v345
  // Predicated region
  $region22: #{wordlenet_forward.1} parent=0 // pred_check
    _
  $region23: #{wordlenet_forward.1} parent=0 // pred_check_branch
    %352 = sbr.rel (0) target = $region25
  $region24: #{wordlenet_forward.1} parent=0 // pred_region
    _
  $region25: #{wordlenet_forward.1} parent=0 // pred_fallthru
    _
  // Predicated region
  $region26: #{wordlenet_forward.1} parent=0 // pred_check
    _
  $region27: #{wordlenet_forward.1} parent=0 // pred_check_branch
    %354 = sbr.rel (0) target = $region29
  $region28: #{wordlenet_forward.1} parent=0 // pred_region
    _
  $region29: #{wordlenet_forward.1} parent=0 // pred_fallthru
    _

</llo_original>
